<compile_context>
chip_gen: v7x
topology: tpu7x:2x2x1
jax: 0.10.0
libtpu: 0.0.40
codegen_flags: <defaults>
</compile_context>

<pallas_src>
import functools

import jax
import jax.numpy as jnp
from jax.experimental import pallas as pl
from jax.experimental.pallas import tpu as pltpu

MID = 512                      # intermediate channel count hard-coded in MultiAtrousModule
COMPUTE_DTYPE = jnp.bfloat16   # MXU operand dtype (accumulation stays f32)


def _maa_kernel(p_ref, w_ref, b_ref, o_ref):
    """Fused (im2col-patches @ folded-weights) + bias + ReLU for one (batch, row-tile).

    p_ref: (1, TM, 27*Cin) bf16   w_ref: (27*Cin, Cout) bf16
    b_ref: (1, Cout) f32          o_ref: (1, TM, Cout)  f32
    """
    y = jnp.dot(p_ref[0], w_ref[...], preferred_element_type=jnp.float32)
    y = y + b_ref[...]
    o_ref[0] = jnp.maximum(y, 0.0).astype(o_ref.dtype)


@functools.partial(jax.jit, static_argnames=("dilations",))
def multi_atrous_forward(x_nhwc, params, *, dilations):
    """x_nhwc: (B, H, W, Cin) float32.  Returns (B, H, W, Cout) float32."""
    B, H, W, Cin = x_nhwc.shape
    Cout = params["b1"].shape[-1]
    d_max = max(dilations)
    HW = H * W
    K = 9 * Cin * len(dilations)          # 27 * Cin

    # ---- fold the 1x1 conv + all biases into the dilated-conv weights (f32, one-time) ----
    w1 = params["w1"]                                           # (3*MID, Cout)
    w_all = jnp.concatenate(
        [params[w].reshape(9 * Cin, MID) @ w1[i * MID:(i + 1) * MID]
         for i, w in enumerate(("w6", "w12", "w18"))], axis=0)  # (27*Cin, Cout)
    b_all = params["b1"] + sum(
        params[b] @ w1[i * MID:(i + 1) * MID]
        for i, b in enumerate(("b6", "b12", "b18")))
    b_all = b_all.reshape(1, Cout)                              # (1, Cout) f32

    # ---- single max-dilation pad + im2col (layout only; matches 'same' padding) ----
    xp = jnp.pad(x_nhwc, ((0, 0), (d_max, d_max), (d_max, d_max), (0, 0)))
    taps = []
    for d in dilations:
        for ky in range(3):
            for kx in range(3):
                r0 = d_max - d + ky * d
                c0 = d_max - d + kx * d
                taps.append(xp[:, r0:r0 + H, c0:c0 + W, :])
    # tap order (dilation, ky, kx, cin) matches the w_all row order above.
    patches = jnp.concatenate(taps, axis=-1).reshape(B, HW, K)

    # ---- Pallas: fused matmul + bias + ReLU over a (batch, row-tile) parallel grid ----
    TM = 128 if HW % 128 == 0 else HW
    grid = (B, HW // TM)

    out = pl.pallas_call(
        _maa_kernel,
        out_shape=jax.ShapeDtypeStruct((B, HW, Cout), jnp.float32),
        grid_spec=pltpu.PrefetchScalarGridSpec(
            num_scalar_prefetch=0,
            grid=grid,
            in_specs=[
                pl.BlockSpec((1, TM, K), lambda b, m: (b, m, 0)),     # patches
                pl.BlockSpec((K, Cout), lambda b, m: (0, 0)),         # folded weights
                pl.BlockSpec((1, Cout), lambda b, m: (0, 0)),         # folded bias
            ],
            out_specs=pl.BlockSpec((1, TM, Cout), lambda b, m: (b, m, 0)),
        ),
        compiler_params=pltpu.CompilerParams(
            dimension_semantics=("parallel", "parallel"),
        ),
    )(patches.astype(COMPUTE_DTYPE), w_all.astype(COMPUTE_DTYPE), b_all)

    return out.reshape(B, H, W, Cout)


def _ref_forward(x_nhwc, params, dilations):
    """Pure-JAX f32 reference (matches the PyTorch MultiAtrousModule forward)."""
    def conv(x, w_hwio, b, d):
        y = jax.lax.conv_general_dilated(
            x, w_hwio, window_strides=(1, 1),
            padding=((d, d), (d, d)), rhs_dilation=(d, d),
            dimension_numbers=("NHWC", "HWIO", "NHWC"))
        return y + b

    x6 = conv(x_nhwc, params["w6"], params["b6"], dilations[0])
    x12 = conv(x_nhwc, params["w12"], params["b12"], dilations[1])
    x18 = conv(x_nhwc, params["w18"], params["b18"], dilations[2])
    cat = jnp.concatenate([x6, x12, x18], axis=-1)              # (B,H,W,3*MID)
    y = jnp.einsum("bhwc,co->bhwo", cat, params["w1"]) + params["b1"]
    return jnp.maximum(y, 0.0)


def init_params(key, in_chans, out_chans):
    ks = jax.random.split(key, 8)
    scale3 = 1.0 / (3 * 3 * in_chans) ** 0.5
    scale1 = 1.0 / (3 * MID) ** 0.5
    return {
        # dilated 3x3 conv weights in HWIO: (3, 3, Cin, 512)
        "w6":  scale3 * jax.random.normal(ks[0], (3, 3, in_chans, MID), jnp.float32),
        "w12": scale3 * jax.random.normal(ks[1], (3, 3, in_chans, MID), jnp.float32),
        "w18": scale3 * jax.random.normal(ks[2], (3, 3, in_chans, MID), jnp.float32),
        "b6":  scale3 * jax.random.normal(ks[3], (MID,), jnp.float32),
        "b12": scale3 * jax.random.normal(ks[4], (MID,), jnp.float32),
        "b18": scale3 * jax.random.normal(ks[5], (MID,), jnp.float32),
        # 1x1 conv: (3*512, Cout) (channel order = [x6 | x12 | x18], as in torch.cat)
        "w1":  scale1 * jax.random.normal(ks[6], (3 * MID, out_chans), jnp.float32),
        "b1":  scale1 * jax.random.normal(ks[7], (out_chans,), jnp.float32),
    }


if __name__ == "__main__":
    key = jax.random.PRNGKey(0)
    B, Cin, H, W = 2, 4, 16, 16
    Cout = 32
    dilations = (2, 4, 6)

    k_x, k_p = jax.random.split(key)
    x_nchw = jax.random.normal(k_x, (B, Cin, H, W), jnp.float32)  # PyTorch-style NCHW
    x_nhwc = jnp.transpose(x_nchw, (0, 2, 3, 1))                  # kernel layout NHWC
    params = init_params(k_p, Cin, Cout)

    out = multi_atrous_forward(x_nhwc, params, dilations=dilations)
    out = jax.block_until_ready(out)

    ref = jax.block_until_ready(_ref_forward(x_nhwc, params, dilations))
    assert out.shape == (B, H, W, Cout)
    # bf16 MXU operands (f32 accumulation): tolerance relaxed to 2e-2 per review.
    assert jnp.allclose(out, ref, atol=2e-2, rtol=2e-2), (
        float(jnp.max(jnp.abs(out - ref))))

    print("KERNEL_OK")
</pallas_src>

<mosaic_0001>
module attributes {stable_mosaic.version = 11 : i64} {
  func.func @_maa_kernel(%arg0: i32, %arg1: i32, %arg2: memref<1x128x108xbf16, #tpu.memory_space<vmem>>, %arg3: memref<108x32xbf16, #tpu.memory_space<vmem>>, %arg4: memref<1x32xf32, #tpu.memory_space<vmem>>, %arg5: memref<1x128x32xf32, #tpu.memory_space<vmem>>) attributes {dimension_semantics = [#tpu.dimension_semantics<parallel>, #tpu.dimension_semantics<parallel>], iteration_bounds = array<i64: 2, 2>, scalar_prefetch = 0 : i64, scratch_operands = 0 : i64, tpu.core_type = #tpu.core_type<tc>, window_params = [{transform_indices = @transform_0, window_bounds = array<i64: 1, 128, 108>}, {pipeline_mode = #tpu.pipeline_mode<synchronous>, transform_indices = @transform_1, window_bounds = array<i64: 108, 32>}, {pipeline_mode = #tpu.pipeline_mode<synchronous>, transform_indices = @transform_2, window_bounds = array<i64: 1, 32>}, {transform_indices = @transform_3, window_bounds = array<i64: 1, 128, 32>}]} {
    %c0 = arith.constant 0 : index
    %c0_0 = arith.constant 0 : index
    %c0_1 = arith.constant 0 : index
    %0 = vector.load %arg2[%c0, %c0_0, %c0_1] : memref<1x128x108xbf16, #tpu.memory_space<vmem>>, vector<1x128x108xbf16>
    %1 = vector.shape_cast %0 : vector<1x128x108xbf16> to vector<128x108xbf16>
    %c0_2 = arith.constant 0 : index
    %c0_3 = arith.constant 0 : index
    %2 = vector.load %arg3[%c0_2, %c0_3] : memref<108x32xbf16, #tpu.memory_space<vmem>>, vector<108x32xbf16>
    %cst = arith.constant dense<0.000000e+00> : vector<128x32xf32>
    %3 = tpu.matmul %1, %2, %cst {dimension_numbers = #tpu.dot_dimension_numbers<[1], [0], [0], [1], [0, 0, 1, 1], [], []>} : vector<128x108xbf16>, vector<108x32xbf16>, vector<128x32xf32> -> vector<128x32xf32>
    %c0_4 = arith.constant 0 : index
    %c0_5 = arith.constant 0 : index
    %4 = vector.load %arg4[%c0_4, %c0_5] : memref<1x32xf32, #tpu.memory_space<vmem>>, vector<1x32xf32>
    %5 = vector.broadcast %4 : vector<1x32xf32> to vector<128x32xf32>
    %6 = arith.addf %3, %5 : vector<128x32xf32>
    %cst_6 = arith.constant 0.000000e+00 : f32
    %7 = vector.broadcast %cst_6 : f32 to vector<128x32xf32>
    %8 = arith.maximumf %6, %7 : vector<128x32xf32>
    %c0_7 = arith.constant 0 : index
    %c0_8 = arith.constant 0 : index
    %c0_9 = arith.constant 0 : index
    %9 = vector.load %arg5[%c0_7, %c0_8, %c0_9] : memref<1x128x32xf32, #tpu.memory_space<vmem>>, vector<1x128x32xf32>
    %10 = vector.shape_cast %9 : vector<1x128x32xf32> to vector<128x32xf32>
    %11 = vector.shape_cast %8 : vector<128x32xf32> to vector<1x128x32xf32>
    tpu.vector_store %arg5[%c0_7, %c0_8, %c0_9], %11 {strides = array<i32>} : memref<1x128x32xf32, #tpu.memory_space<vmem>>, vector<1x128x32xf32>,
    return
  }
  func.func @transform_0(%arg0: i32, %arg1: i32) -> (i32, i32, i32) {
    %c0_i32 = arith.constant 0 : i32
    %c0_i32_0 = arith.constant 0 : i32
    return %arg0, %arg1, %c0_i32 : i32, i32, i32
  }
  func.func @transform_1(%arg0: i32, %arg1: i32) -> (i32, i32) {
    %c0_i32 = arith.constant 0 : i32
    %c0_i32_0 = arith.constant 0 : i32
    %c0_i32_1 = arith.constant 0 : i32
    return %c0_i32, %c0_i32_0 : i32, i32
  }
  func.func @transform_2(%arg0: i32, %arg1: i32) -> (i32, i32) {
    %c0_i32 = arith.constant 0 : i32
    %c0_i32_0 = arith.constant 0 : i32
    %c0_i32_1 = arith.constant 0 : i32
    return %c0_i32, %c0_i32_0 : i32, i32
  }
  func.func @transform_3(%arg0: i32, %arg1: i32) -> (i32, i32, i32) {
    %c0_i32 = arith.constant 0 : i32
    %c0_i32_0 = arith.constant 0 : i32
    return %arg0, %arg1, %c0_i32 : i32, i32, i32
  }
}

</mosaic_0001>

<llo_original>
// kernel: multi_atrous_forward.1
$region0: #{multi_atrous_forward.1}
  #allocation0 [shape = 'u32[]', space=smem, size = 0x4, offset = 0x4, fixed_abs, tag = 'smem constant byte address 0x4 - core index']
  #allocation1 [shape = 'u32[144,128]{1,0:T(1,128)}', space=vmem, size = 0x12000, scoped, tag = 'internal scratch']
  %s0 = inlined_call_operand.vmem [shape: bf16[2,256,108], index: 0, kind: input, shape index: {}]
  %s1 = inlined_call_operand.vmem [shape: bf16[108,32], index: 1, kind: input, shape index: {}]
  %s2 = inlined_call_operand.vmem [shape: f32[1,32], index: 2, kind: input, shape index: {}]
  %s3 = inlined_call_operand.hbm [shape: f32[2,256,32], index: 3, kind: output, shape index: {}]
  %s4 = sld [smem:[#allocation0]]
  $region45: #{multi_atrous_forward.1} parent=0
    _
  %s6 = ssub.s32 1, %s4
  %s7 = scalar_select 0, %s6, %s4
  $region1: #{multi_atrous_forward.1} parent=0
    #allocation2 [shape = 'u8[131072]{0}', space=vmem, size = 0x20000, scoped, tag = 'output window, operand 0']
    #allocation3 [shape = 's32[2]{0}', space=sflag, size = 0x8, scoped, tag = 'scoped memory for multi_atrous_forward.1']
    %8 = vsyncpa [#allocation3], 0
    %s9 = scalar_lea.sflag [#allocation3], 1
    %10 = vsyncpa %s9, 0
    loop: start=0, step=1, limit=6
    $region2: #{multi_atrous_forward.1} parent=1 // loop_pre_header
      _
    $region3: #{multi_atrous_forward.1} parent=1 // loop_header
      %s12 = sphi 0, %s16
      %p13 = scmp.ge.s32.totalorder %s12, 6
      %s19 = sphi 0, %s31
      %s20 = sphi 0, %s27
      %s21 = sphi 0, %s19
      %s22 = sphi 0, %s20
      %s23 = sphi 0, %s21
      %s24 = sphi 0, %s22
      %s36 = sphi 0, %s38
      %s39 = sphi 0, %s36
      %s40 = sphi 0, %s39
      %s56 = sphi 0, %s40
      %s60 = sphi 0, %s60
      %s62 = sphi 0, %s60
      %s63 = sphi 0, %s62
      %s77 = sphi 0, %s63
      %s81 = sphi 0, %s81
      %s83 = sphi 0, %s81
      %s84 = sphi 0, %s83
      %s98 = sphi 0, %s84
      %s106 = sphi 0, %s108
      %s109 = sphi 0, %s106
      %s110 = sphi 0, %s109
      %s126 = sphi 0, %s110
    $region4: #{multi_atrous_forward.1} parent=1 // loop_header_branch
      %15 = sbr.rel (%p13) target = $region8
    $region5: #{multi_atrous_forward.1} parent=1 // loop_body
      %s17 = ssub.s32 %s12, 1
      %s18 = ssub.s32 %s12, 2
      %s25 = sadd.s32 1, %s20
      %p26 = scmp.ge.s32.totalorder %s25, 2
      %s27 = scalar_select %p26, 0, %s25
      %s28 = sadd.s32 1, %s19
      %s29 = scalar_select %p26, %s28, %s19
      %p30 = scmp.ge.s32.totalorder %s29, 2
      %s31 = scalar_select %p30, 0, %s29
      %s32 = ssub.s32 %s19, %s31
      %s33 = ssub.s32 %s20, %s27
      %s34 = sor.u32 %s32, %s33
      %p35 = scmp.eq.s32.totalorder %s34, 0
      %s37 = sadd.s32 %s36, 1
      %s38 = scalar_select %p35, %s36, %s37
      %p41 = pneg %p35
      %p42 = scmp.eq.s32.totalorder %s12, 3
      %p43 = por %p41, %p42
      %p44 = scmp.ne.s32.totalorder %s36, %s39
      %p45 = scmp.eq.s32.totalorder %s12, 0
      %p46 = por %p44, %p45
      %p47 = scmp.ne.s32.totalorder %s36, %s39
      %p48 = scmp.eq.s32.totalorder %s17, 3
      %p49 = por %p47, %p48
      %p50 = scmp.ne.s32.totalorder %s39, %s40
      %p51 = scmp.eq.s32.totalorder %s17, 0
      %p52 = por %p50, %p51
      %p53 = scmp.ne.s32.totalorder %s39, %s40
      %p54 = scmp.eq.s32.totalorder %s18, 3
      %p55 = por %p53, %p54
      %p57 = scmp.ne.s32.totalorder %s40, %s56
      %p58 = scmp.eq.s32.totalorder %s18, 0
      %p59 = por %p57, %p58
      %s61 = sadd.s32 %s60, 1
      %p64 = scmp.eq.s32.totalorder %s12, 3
      %p65 = scmp.ne.s32.totalorder %s60, %s62
      %p66 = scmp.eq.s32.totalorder %s12, 0
      %p67 = por %p65, %p66
      %p68 = scmp.ne.s32.totalorder %s60, %s62
      %p69 = scmp.eq.s32.totalorder %s17, 3
      %p70 = por %p68, %p69
      %p71 = scmp.ne.s32.totalorder %s62, %s63
      %p72 = scmp.eq.s32.totalorder %s17, 0
      %p73 = por %p71, %p72
      %p74 = scmp.ne.s32.totalorder %s62, %s63
      %p75 = scmp.eq.s32.totalorder %s18, 3
      %p76 = por %p74, %p75
      %p78 = scmp.ne.s32.totalorder %s63, %s77
      %p79 = scmp.eq.s32.totalorder %s18, 0
      %p80 = por %p78, %p79
      %s82 = sadd.s32 %s81, 1
      %p85 = scmp.eq.s32.totalorder %s12, 3
      %p86 = scmp.ne.s32.totalorder %s81, %s83
      %p87 = scmp.eq.s32.totalorder %s12, 0
      %p88 = por %p86, %p87
      %p89 = scmp.ne.s32.totalorder %s81, %s83
      %p90 = scmp.eq.s32.totalorder %s17, 3
      %p91 = por %p89, %p90
      %p92 = scmp.ne.s32.totalorder %s83, %s84
      %p93 = scmp.eq.s32.totalorder %s17, 0
      %p94 = por %p92, %p93
      %p95 = scmp.ne.s32.totalorder %s83, %s84
      %p96 = scmp.eq.s32.totalorder %s18, 3
      %p97 = por %p95, %p96
      %p99 = scmp.ne.s32.totalorder %s84, %s98
      %p100 = scmp.eq.s32.totalorder %s18, 0
      %p101 = por %p99, %p100
      %s102 = ssub.s32 %s19, %s31
      %s103 = ssub.s32 %s20, %s27
      %s104 = sor.u32 %s102, %s103
      %p105 = scmp.eq.s32.totalorder %s104, 0
      %s107 = sadd.s32 %s106, 1
      %s108 = scalar_select %p105, %s106, %s107
      %p111 = pneg %p105
      %p112 = scmp.eq.s32.totalorder %s12, 3
      %p113 = por %p111, %p112
      %p114 = scmp.ne.s32.totalorder %s106, %s109
      %p115 = scmp.eq.s32.totalorder %s12, 0
      %p116 = por %p114, %p115
      %p117 = scmp.ne.s32.totalorder %s106, %s109
      %p118 = scmp.eq.s32.totalorder %s17, 3
      %p119 = por %p117, %p118
      %p120 = scmp.ne.s32.totalorder %s109, %s110
      %p121 = scmp.eq.s32.totalorder %s17, 0
      %p122 = por %p120, %p121
      %p123 = scmp.ne.s32.totalorder %s109, %s110
      %p124 = scmp.eq.s32.totalorder %s18, 3
      %p125 = por %p123, %p124
      %p127 = scmp.ne.s32.totalorder %s110, %s126
      %p128 = scmp.eq.s32.totalorder %s18, 0
      %p129 = por %p127, %p128
      %p130 = scmp.le.s32.totalorder 1, %s12
      %p131 = scmp.lt.s32.totalorder %s12, 5
      %p132 = pnand %p130, %p131
      %p133 = pneg %p132
      // Predicated region
      $region9: #{multi_atrous_forward.1} parent=5 // pred_check
        _
      $region10: #{multi_atrous_forward.1} parent=5 // pred_check_branch
        %135 = sbr.rel (%p132) target = $region12
      $region11: #{multi_atrous_forward.1} parent=5 // pred_region
        %s136 = ssub.s32 %s12, 1
        // Predicated region
        $region13: #{multi_atrous_forward.1} parent=11 // pred_check
          %p137 = pneg %p73
        $region14: #{multi_atrous_forward.1} parent=11 // pred_check_branch
          %139 = sbr.rel (%p137) target = $region16
        $region15: #{multi_atrous_forward.1} parent=11 // pred_region
          _
        $region16: #{multi_atrous_forward.1} parent=11 // pred_fallthru
          _
        // Predicated region
        $region17: #{multi_atrous_forward.1} parent=11 // pred_check
          %p140 = pneg %p94
        $region18: #{multi_atrous_forward.1} parent=11 // pred_check_branch
          %142 = sbr.rel (%p140) target = $region20
        $region19: #{multi_atrous_forward.1} parent=11 // pred_region
          _
        $region20: #{multi_atrous_forward.1} parent=11 // pred_fallthru
          _
      $region12: #{multi_atrous_forward.1} parent=5 // pred_fallthru
        _
      %p143 = scmp.lt.s32.totalorder %s12, 4
      // Predicated region
      $region21: #{multi_atrous_forward.1} parent=5 // pred_check
        %p144 = pneg %p143
      $region22: #{multi_atrous_forward.1} parent=5 // pred_check_branch
        %146 = sbr.rel (%p144) target = $region24
      $region23: #{multi_atrous_forward.1} parent=5 // pred_region
        // Predicated region
        $region25: #{multi_atrous_forward.1} parent=23 // pred_check
          %p147 = pneg %p46
        $region26: #{multi_atrous_forward.1} parent=23 // pred_check_branch
          %149 = sbr.rel (%p147) target = $region28
        $region27: #{multi_atrous_forward.1} parent=23 // pred_region
          %s150 = smul.u32 16, %s20
          %p151 = scmp.lt.s32.totalorder %s19, 1
          %s152 = scalar_select %p151, %s19, 1
          %p153 = scmp.lt.s32.totalorder %s150, 31
          %s154 = scalar_select %p153, %s150, 31
          %s155 = smul.addr %s152, 32
          %s156 = sadd.s32 %s154, %s155
          %s157 = smul.addr %s156, 4
          %s158 = scalar_lea.vmem %s0, %s157
          %s159 = smul.u32 16, %s20
        $region28: #{multi_atrous_forward.1} parent=23 // pred_fallthru
          _
      $region24: #{multi_atrous_forward.1} parent=5 // pred_fallthru
        _
      %p160 = scmp.le.s32.totalorder 1, %s12
      %p161 = scmp.lt.s32.totalorder %s12, 5
      %p162 = pnand %p160, %p161
      %p163 = pneg %p162
      // Predicated region
      $region29: #{multi_atrous_forward.1} parent=5 // pred_check
        _
      $region30: #{multi_atrous_forward.1} parent=5 // pred_check_branch
        %165 = sbr.rel (%p162) target = $region32
      $region31: #{multi_atrous_forward.1} parent=5 // pred_region
        %s166 = ssub.s32 %s12, 1
        %s167 = smul.u32 16, %s22
        %p168 = scmp.lt.s32.totalorder %s21, 1
        %s169 = scalar_select %p168, %s21, 1
        %p170 = scmp.lt.s32.totalorder %s167, 31
        %s171 = scalar_select %p170, %s167, 31
        %s172 = smul.addr %s169, 32
        %s173 = sadd.s32 %s171, %s172
        %s174 = smul.addr %s173, 4
        %s175 = scalar_lea.vmem %s0, %s174
        %p176 = pneg %p52
        %p177 = pneg %p49
        %p178 = pneg %p73
        %p179 = pneg %p70
        %p180 = pneg %p94
        %p181 = pneg %p91
        %p182 = pneg %p122
        %p183 = pneg %p119
        %s184 = sand.u32 %s109, 1
        %s185 = scalar_lea.sflag [#allocation3], %s184
        %s186 = sand.u32 %s109, 1
        %s187 = smul.addr %s186, 128
        %s188 = scalar_lea.vmem [#allocation2], %s187
        %s189 = smul.u32 16, %s22
        %p190 = scmp.lt.s32.totalorder %s21, 1
        %s191 = scalar_select %p190, %s21, 1
        %p192 = scmp.lt.s32.totalorder %s189, 31
        %s193 = scalar_select %p192, %s189, 31
        %s194 = smul.addr %s191, 32
        %s195 = sadd.s32 %s193, %s194
        %s196 = smul.addr %s195, 4
        %s197 = scalar_lea.vmem %s0, %s196
        %s198 = smul.u32 16, %s22
        %s199 = smul.u32 16, %s22
        %v201 = vld [vmem:[%s197] sm:$0xf]
        %v202 = vld [vmem:[%s197 + $0x4] sm:$0xf]
        %v203 = vld [vmem:[%s197 + $0x8] sm:$0xf]
        %v204 = vld [vmem:[%s197 + $0xc] sm:$0xf]
        %v205 = vld [vmem:[%s197 + $0x10] sm:$0xf]
        %v206 = vld [vmem:[%s197 + $0x14] sm:$0xf]
        %v207 = vld [vmem:[%s197 + $0x18] sm:$0xf]
        %v208 = vld [vmem:[%s197 + $0x1c] sm:$0xf]
        %v209 = vld [vmem:[%s197 + $0x20] sm:$0xf]
        %v210 = vld [vmem:[%s197 + $0x24] sm:$0xf]
        %v211 = vld [vmem:[%s197 + $0x28] sm:$0xf]
        %v212 = vld [vmem:[%s197 + $0x2c] sm:$0xf]
        %v213 = vld [vmem:[%s197 + $0x30] sm:$0xf]
        %v214 = vld [vmem:[%s197 + $0x34] sm:$0xf]
        %v215 = vld [vmem:[%s197 + $0x38] sm:$0xf]
        %v216 = vld [vmem:[%s197 + $0x3c] sm:$0xf]
        %v217 = vld [vmem:[%s1] sm:$0xf]
        %v218 = vld [vmem:[%s1 + $0x4] sm:$0xf]
        %v219 = vld [vmem:[%s1 + $0x8] sm:$0xf]
        %v220 = vld [vmem:[%s1 + $0xc] sm:$0xf]
        %v221 = vld [vmem:[%s1 + $0x10] sm:$0xf]
        %v222 = vld [vmem:[%s1 + $0x14] sm:$0xf]
        %v223 = vld [vmem:[%s1 + $0x18] sm:$0xf]
        %v224 = vld [vmem:[%s1 + $0x1c] sm:$0xf]
        %v225 = vld [vmem:[%s1 + $0x20] sm:$0xf]
        %v226 = vld [vmem:[%s1 + $0x24] sm:$0xf]
        %v227 = vld [vmem:[%s1 + $0x28] sm:$0xf]
        %v228 = vld [vmem:[%s1 + $0x2c] sm:$0xf]
        %v229 = vld [vmem:[%s1 + $0x30] sm:$0xf]
        %v230 = vld [vmem:[%s1 + $0x34] sm:$0x3]
        %v231 = vld [vmem:[%s2] sm:$0x1]
        %v233 = vlaneseq
        %v234 = vshrl.u32 %v233, 7
        %v235 = vsub.s32 0, %v234
        %v236 = vrot.slane %v231, %v235
        %v254 = vunpack.c.l.b16 %v201
        %v255 = vunpack.c.l.b16 %v202
        %v256 = vunpack.c.l.b16 %v203
        %v257 = vunpack.c.l.b16 %v204
        %v258 = vunpack.c.l.b16 %v205
        %v259 = vunpack.c.l.b16 %v206
        %v260 = vunpack.c.l.b16 %v207
        %v261 = vunpack.c.l.b16 %v208
        %v262 = vunpack.c.l.b16 %v209
        %v263 = vunpack.c.l.b16 %v210
        %v264 = vunpack.c.l.b16 %v211
        %v265 = vunpack.c.l.b16 %v212
        %v266 = vunpack.c.l.b16 %v213
        %v267 = vunpack.c.l.b16 %v214
        %v268 = vunpack.c.l.b16 %v215
        %v269 = vunpack.c.l.b16 %v216
        %v270 = vpack.c.b16 %v255, %v254
        %v271 = vpack.c.b16 %v257, %v256
        %v272 = vpack.c.b16 %v259, %v258
        %v273 = vpack.c.b16 %v261, %v260
        %v274 = vpack.c.b16 %v263, %v262
        %v275 = vpack.c.b16 %v265, %v264
        %v276 = vpack.c.b16 %v267, %v266
        %v277 = vpack.c.b16 %v269, %v268
        %v292 = vunpack.c.l.b16 %v217
        %v293 = vunpack.c.l.b16 %v218
        %v294 = vunpack.c.l.b16 %v219
        %v295 = vunpack.c.l.b16 %v220
        %v296 = vunpack.c.l.b16 %v221
        %v297 = vunpack.c.l.b16 %v222
        %v298 = vunpack.c.l.b16 %v223
        %v299 = vunpack.c.l.b16 %v224
        %v300 = vunpack.c.l.b16 %v225
        %v301 = vunpack.c.l.b16 %v226
        %v302 = vunpack.c.l.b16 %v227
        %v303 = vunpack.c.l.b16 %v228
        %v304 = vunpack.c.l.b16 %v229
        %v305 = vunpack.c.l.b16 %v230
        %v306 = vpack.c.b16 %v293, %v292
        %v307 = vpack.c.b16 %v295, %v294
        %v308 = vpack.c.b16 %v297, %v296
        %v309 = vpack.c.b16 %v299, %v298
        %v310 = vpack.c.b16 %v301, %v300
        %v311 = vpack.c.b16 %v303, %v302
        %v312 = vpack.c.b16 %v305, %v304
        %vm319 = vcmask 883712
        %v321 = vsel %vm319, %v270, 0
        %v324 = vsel %vm319, %v271, 0
        %v327 = vsel %vm319, %v272, 0
        %v330 = vsel %vm319, %v273, 0
        %v333 = vsel %vm319, %v274, 0
        %v336 = vsel %vm319, %v275, 0
        %v339 = vsel %vm319, %v276, 0
        %v342 = vsel %vm319, %v277, 0
        %vm344 = vcmask 1045504
        %v346 = vsel %vm344, %v312, 0
        %348 = vmatprep.subr.bf16.mxu0 0
        %349 = vmatpush1.bf16.msra.mxu0 %v306
        %350 = vmatprep.subr.bf16.mxu0 0
        %351 = vmatpush1.bf16.msra.mxu0 %v307
        %352 = vmatprep.subr.bf16.mxu0 0
        %353 = vmatpush1.bf16.msra.mxu0 %v308
        %354 = vmatprep.subr.bf16.mxu0 0
        %355 = vmatpush1.bf16.msra.mxu0 %v309
        %356 = vmatprep.subr.bf16.mxu0 0
        %357 = vmatpush1.bf16.msra.mxu0 %v310
        %358 = vmatprep.subr.bf16.mxu0 0
        %359 = vmatpush1.bf16.msra.mxu0 %v311
        %360 = vmatprep.subr.bf16.mxu0 0
        %361 = vmatpush1.bf16.msra.mxu0 %v346
        %362 = vmatprep.subr.bf16.mxu0 0
        %363 = vmatpush1.bf16.msra.mxu0 0
        %364 = vmatprep.subr.bf16.mxu0 0
        %365 = vmatpush1.bf16.msra.mxu0 0
        %366 = vmatprep.subr.bf16.mxu0 0
        %367 = vmatpush1.bf16.msra.mxu0 0
        %368 = vmatprep.subr.bf16.mxu0 0
        %369 = vmatpush1.bf16.msra.mxu0 0
        %370 = vmatprep.subr.bf16.mxu0 0
        %371 = vmatpush1.bf16.msra.mxu0 0
        %372 = vmatprep.subr.bf16.mxu0 0
        %373 = vmatpush1.bf16.msra.mxu0 0
        %374 = vmatprep.subr.bf16.mxu0 0
        %375 = vmatpush1.bf16.msra.mxu0 0
        %376 = vmatprep.subr.bf16.mxu0 0
        %377 = vmatpush1.bf16.msra.mxu0 0
        %378 = vmatprep.subr.bf16.mxu0 0
        %379 = vmatpush1.bf16.msra.mxu0 0
        %380 = vmatprep.mubr.bf16.mxu0 0
        %381 = vmatmul.mubr.bf16.gmra.mrb[0].mxu0 %v321
        %v382 = vpop.f32.mrb[0].mxu0
        %v383 = vadd.f32 %v236, %v382
        %v384 = vpop.f32.mrb[0].mxu0
        %v385 = vpop.f32.mrb[0].mxu0
        %v386 = vadd.f32 %v236, %v385
        %v387 = vpop.f32.mrb[0].mxu0
        %388 = vmatprep.mubr.bf16.mxu0 0
        %389 = vmatmul.mubr.bf16.gmra.mrb[0].mxu0 %v324
        %v390 = vpop.f32.mrb[0].mxu0
        %v391 = vadd.f32 %v236, %v390
        %v392 = vpop.f32.mrb[0].mxu0
        %v393 = vpop.f32.mrb[0].mxu0
        %v394 = vadd.f32 %v236, %v393
        %v395 = vpop.f32.mrb[0].mxu0
        %396 = vmatprep.mubr.bf16.mxu0 0
        %397 = vmatmul.mubr.bf16.gmra.mrb[0].mxu0 %v327
        %v398 = vpop.f32.mrb[0].mxu0
        %v399 = vadd.f32 %v236, %v398
        %v400 = vpop.f32.mrb[0].mxu0
        %v401 = vpop.f32.mrb[0].mxu0
        %v402 = vadd.f32 %v236, %v401
        %v403 = vpop.f32.mrb[0].mxu0
        %404 = vmatprep.mubr.bf16.mxu0 0
        %405 = vmatmul.mubr.bf16.gmra.mrb[0].mxu0 %v330
        %v406 = vpop.f32.mrb[0].mxu0
        %v407 = vadd.f32 %v236, %v406
        %v408 = vpop.f32.mrb[0].mxu0
        %v409 = vpop.f32.mrb[0].mxu0
        %v410 = vadd.f32 %v236, %v409
        %v411 = vpop.f32.mrb[0].mxu0
        %412 = vmatprep.mubr.bf16.mxu0 0
        %413 = vmatmul.mubr.bf16.gmra.mrb[0].mxu0 %v333
        %v414 = vpop.f32.mrb[0].mxu0
        %v415 = vadd.f32 %v236, %v414
        %v416 = vpop.f32.mrb[0].mxu0
        %v417 = vpop.f32.mrb[0].mxu0
        %v418 = vadd.f32 %v236, %v417
        %v419 = vpop.f32.mrb[0].mxu0
        %420 = vmatprep.mubr.bf16.mxu0 0
        %421 = vmatmul.mubr.bf16.gmra.mrb[0].mxu0 %v336
        %v422 = vpop.f32.mrb[0].mxu0
        %v423 = vadd.f32 %v236, %v422
        %v424 = vpop.f32.mrb[0].mxu0
        %v425 = vpop.f32.mrb[0].mxu0
        %v426 = vadd.f32 %v236, %v425
        %v427 = vpop.f32.mrb[0].mxu0
        %428 = vmatprep.mubr.bf16.mxu0 0
        %429 = vmatmul.mubr.bf16.gmra.mrb[0].mxu0 %v339
        %v430 = vpop.f32.mrb[0].mxu0
        %v431 = vadd.f32 %v236, %v430
        %v432 = vpop.f32.mrb[0].mxu0
        %v433 = vpop.f32.mrb[0].mxu0
        %v434 = vadd.f32 %v236, %v433
        %v435 = vpop.f32.mrb[0].mxu0
        %436 = vmatprep.mubr.bf16.mxu0 0
        %437 = vmatmul.mubr.bf16.gmra.mrb[0].mxu0 %v342
        %v438 = vpop.f32.mrb[0].mxu0
        %v439 = vadd.f32 %v236, %v438
        %v440 = vpop.f32.mrb[0].mxu0
        %v441 = vpop.f32.mrb[0].mxu0
        %v442 = vadd.f32 %v236, %v441
        %v443 = vpop.f32.mrb[0].mxu0
        %444 = vdwg.mxu0
        %v445 = vmax.f32 %v383, 0.0
        %v446 = vmax.f32 %v386, 0.0
        %v447 = vmax.f32 %v391, 0.0
        %v448 = vmax.f32 %v394, 0.0
        %v449 = vmax.f32 %v399, 0.0
        %v450 = vmax.f32 %v402, 0.0
        %v451 = vmax.f32 %v407, 0.0
        %v452 = vmax.f32 %v410, 0.0
        %v453 = vmax.f32 %v415, 0.0
        %v454 = vmax.f32 %v418, 0.0
        %v455 = vmax.f32 %v423, 0.0
        %v456 = vmax.f32 %v426, 0.0
        %v457 = vmax.f32 %v431, 0.0
        %v458 = vmax.f32 %v434, 0.0
        %v459 = vmax.f32 %v439, 0.0
        %v460 = vmax.f32 %v442, 0.0
        %vm461 = vcmask 261120
        %462 = vst.msk [vmem:[%s188] sm:$0xff] %vm461, %v445
        %463 = vst.msk [vmem:[%s188 + $0x8] sm:$0xff] %vm461, %v446
        %464 = vst.msk [vmem:[%s188 + $0x10] sm:$0xff] %vm461, %v447
        %465 = vst.msk [vmem:[%s188 + $0x18] sm:$0xff] %vm461, %v448
        %466 = vst.msk [vmem:[%s188 + $0x20] sm:$0xff] %vm461, %v449
        %467 = vst.msk [vmem:[%s188 + $0x28] sm:$0xff] %vm461, %v450
        %468 = vst.msk [vmem:[%s188 + $0x30] sm:$0xff] %vm461, %v451
        %469 = vst.msk [vmem:[%s188 + $0x38] sm:$0xff] %vm461, %v452
        %470 = vst.msk [vmem:[%s188 + $0x40] sm:$0xff] %vm461, %v453
        %471 = vst.msk [vmem:[%s188 + $0x48] sm:$0xff] %vm461, %v454
        %472 = vst.msk [vmem:[%s188 + $0x50] sm:$0xff] %vm461, %v455
        %473 = vst.msk [vmem:[%s188 + $0x58] sm:$0xff] %vm461, %v456
        %474 = vst.msk [vmem:[%s188 + $0x60] sm:$0xff] %vm461, %v457
        %475 = vst.msk [vmem:[%s188 + $0x68] sm:$0xff] %vm461, %v458
        %476 = vst.msk [vmem:[%s188 + $0x70] sm:$0xff] %vm461, %v459
        %477 = vst.msk [vmem:[%s188 + $0x78] sm:$0xff] %vm461, %v460
        %s478 = sand.u32 %s109, 1
        %s479 = scalar_lea.sflag [#allocation3], %s478
        %s480 = sand.u32 %s109, 1
        %s481 = smul.addr %s480, 128
        %s482 = scalar_lea.vmem [#allocation2], %s481
        // Predicated region
        $region33: #{multi_atrous_forward.1} parent=31 // pred_check
          %p483 = pneg %p119
        $region34: #{multi_atrous_forward.1} parent=31 // pred_check_branch
          %485 = sbr.rel (%p483) target = $region36
        $region35: #{multi_atrous_forward.1} parent=31 // pred_region
          %s486 = smul.u32 16, %s22
          %s488 = ssub.s32 2048, 2048
          %489 = vsyncadd %s479, %s488
          %s490 = smul.addr %s21, 32
          %s491 = sadd.s32 %s486, %s490
          %s492 = smul.addr %s491, 128
          %s493 = scalar_lea.hbm %s3, %s492
          %s494 = sshll.u32 %s482, 4
          %s495 = int_to_ptr.vmem [resolvable:$true] %s494
          %500 = dma.vmem_to_hbm [thread:$0]  %s495, 2048, %s493, %s479, 128, 128, 8
        $region36: #{multi_atrous_forward.1} parent=31 // pred_fallthru
          _
      $region32: #{multi_atrous_forward.1} parent=5 // pred_fallthru
        _
      %p501 = scmp.le.s32.totalorder 2, %s12
      // Predicated region
      $region37: #{multi_atrous_forward.1} parent=5 // pred_check
        %p502 = pneg %p501
      $region38: #{multi_atrous_forward.1} parent=5 // pred_check_branch
        %504 = sbr.rel (%p502) target = $region40
      $region39: #{multi_atrous_forward.1} parent=5 // pred_region
        %s505 = ssub.s32 %s12, 2
        // Predicated region
        $region41: #{multi_atrous_forward.1} parent=39 // pred_check
          %p506 = pneg %p125
        $region42: #{multi_atrous_forward.1} parent=39 // pred_check_branch
          %508 = sbr.rel (%p506) target = $region44
        $region43: #{multi_atrous_forward.1} parent=39 // pred_region
          %s509 = sand.u32 %s110, 1
          %s510 = scalar_lea.sflag [#allocation3], %s509
          %s511 = sand.u32 %s110, 1
          %s512 = smul.addr %s511, 128
          %s513 = scalar_lea.vmem [#allocation2], %s512
          %514 = dma.done %s510, 2048
        $region44: #{multi_atrous_forward.1} parent=39 // pred_fallthru
          _
      $region40: #{multi_atrous_forward.1} parent=5 // pred_fallthru
        _
    $region6: #{multi_atrous_forward.1} parent=1 // loop_footer
      %s16 = sadd.s32 1, %s12
    $region7: #{multi_atrous_forward.1} parent=1 // loop_footer_branch
      %11 = sbr.rel target = $region3
    $region8: #{multi_atrous_forward.1} parent=1 // loop_exit
      _
    %515 = vsyncpa [#allocation3], 1
    %s516 = scalar_lea.sflag [#allocation3], 1
    %517 = vsyncpa %s516, 1

</llo_original>
